<compile_context>
chip_gen: v7x
topology: tpu7x:2x2x1
jax: 0.10.0
libtpu: 0.0.40
codegen_flags: <defaults>
</compile_context>

<pallas_src>
import jax
import jax.numpy as jnp
from jax import lax
from jax.experimental import pallas as pl
from jax.experimental.pallas import tpu as pltpu

NEG_SLOPE = 0.2  # LeakyReLU slope used by get_linear_discriminator_block


def _leaky_relu(x):
    return jnp.where(x >= 0, x, NEG_SLOPE * x)


def _round_up(n, m):
    return ((n + m - 1) // m) * m


# ---------------------------------------------------------------------------
# Generation detection (guarded: any failure falls back to safe defaults).
# ---------------------------------------------------------------------------
def _tpu_vmem_bytes():
    try:
        return int(pltpu.get_tpu_info().vmem_capacity_bytes)
    except Exception:
        return 64 * 2**20  # conservative: v7x per-TensorCore VMEM


def _num_tensorcores(vmem_cap_bytes):
    # v7x: 2 TensorCores/chip with 64 MiB VMEM each; v5e/v6e: 1 TC, 128 MiB.
    return 2 if vmem_cap_bytes <= 64 * 2**20 else 1


def _default_act_dtype():
    # bf16 inter-layer activations on v6e/v7x (bf16 VPU); f32 on v5e (no bf16 VALU).
    try:
        kind = jax.devices()[0].device_kind.lower()
        if "v5 lite" in kind or "v5e" in kind or "v5lite" in kind:
            return jnp.float32
    except Exception:
        pass
    return jnp.bfloat16


def _choose_tile_b(B, per_row_bytes, budget_bytes, num_tc):
    """MXU-aligned batch tile, sized to the VMEM budget and TC count."""
    if B <= 128:
        # One block equal to the full array: no padding, no partial blocks.
        return B
    max_rows = max(int(budget_bytes) // max(int(per_row_bytes), 1), 128)
    cap = min(1024 if num_tc == 1 else 512, max_rows)
    candidates = [c for c in (1024, 512, 256, 128) if c <= cap and c <= B]
    if not candidates:
        candidates = [128]
    if num_tc >= 2:
        # v7x: prefer the biggest tile with an even (>= num_tc) step count so
        # both TensorCores get equal work.
        for c in candidates:
            steps = -(-B // c)
            if steps >= num_tc and steps % num_tc == 0:
                return c
        for c in candidates:
            if -(-B // c) >= num_tc:
                return c
        return candidates[-1]
    # Single TensorCore (v5e/v6e): biggest tile wins (fewer per-step overheads).
    return candidates[0]


# ---------------------------------------------------------------------------
# Kernel
# ---------------------------------------------------------------------------
def _make_kernel(act_dtype):
    bf16 = jnp.bfloat16

    def disc_mlp_kernel(x_ref,
                        w1_ref, b1_ref,
                        w2_ref, b2_ref,
                        w3_ref, b3_ref,
                        w4_ref, b4_ref,
                        o_ref):
        """Fused 4-layer MLP discriminator for one batch tile (all in VMEM)."""

        def layer(h, w_ref, b_ref):
            # bf16 MXU matmul, f32 accumulation; bias + LeakyReLU in act_dtype
            # (bf16 on v6e/v7x, f32 on v5e); result cast to bf16 for next MXU.
            acc = jnp.dot(h, w_ref[...], preferred_element_type=jnp.float32)
            return _leaky_relu(acc.astype(act_dtype) + b_ref[...]).astype(bf16)

        h = x_ref[...].astype(bf16)      # no-op when x is streamed as bf16
        h = layer(h, w1_ref, b1_ref)
        h = layer(h, w2_ref, b2_ref)
        h = layer(h, w3_ref, b3_ref)
        # Final layer (out_features == 1): contract w4 row (1, hidden) with
        # h (tile_b, hidden) on the lane dim -> lane-dense (1, tile_b) logits,
        # so the output store is a full unmasked vst.
        logits = lax.dot_general(
            w4_ref[...], h,
            dimension_numbers=(((1,), (1,)), ((), ())),
            preferred_element_type=jnp.float32)              # (1, tile_b)
        o_ref[...] = (logits + b4_ref[...]).astype(o_ref.dtype)

    return disc_mlp_kernel


# ---------------------------------------------------------------------------
# Wrapper
# ---------------------------------------------------------------------------
def discriminator_forward(x, params, *, tile_b=None, act_dtype=None):
    """x: (B, im_dim) float32 or bfloat16. Returns (B, 1) float32 logits.

    Passing x already in bf16 halves its HBM traffic (the dominant stream);
    no extra HBM copy of x is made either way."""
    B, im_dim = x.shape
    (w1, b1), (w2, b2), (w3, b3), (w4, b4) = params
    h1, h2, h3 = w1.shape[1], w2.shape[1], w3.shape[1]

    vmem_cap = _tpu_vmem_bytes()
    num_tc = _num_tensorcores(vmem_cap)
    if act_dtype is None:
        act_dtype = _default_act_dtype()
    act_dtype = jnp.dtype(act_dtype)

    bf16 = jnp.bfloat16
    w1b, w2b, w3b = (w.astype(bf16) for w in (w1, w2, w3))
    w4_row = w4.reshape(1, -1).astype(bf16)                  # (1, hidden)
    b1a, b2a, b3a = (b.reshape(1, -1).astype(act_dtype) for b in (b1, b2, b3))
    b4f = b4.reshape(1, -1).astype(jnp.float32)

    x_bytes = jnp.dtype(x.dtype).itemsize
    act_bytes = act_dtype.itemsize
    weight_bytes = int(sum(int(w.size) for w in (w1b, w2b, w3b, w4_row)) * 2
                       + sum(int(b.size) for b in (b1a, b2a, b3a)) * act_bytes
                       + int(b4f.size) * 4)

    # Generation-aware VMEM request: never ask for the full physical capacity
    # (headroom for Mosaic internal scratch): 52 MiB on v7x-sized VMEM, up to
    # ~100 MiB on v5e/v6e (128 MiB physical).
    if vmem_cap <= 64 * 2**20:
        usable = 52 * 2**20
    else:
        usable = min(100 * 2**20, vmem_cap - 24 * 2**20)
    headroom = 4 * 2**20

    # Per-batch-row VMEM cost of one tile: x double buffer, in-kernel bf16 x
    # copy (only if x streams as f32), f32 matmul accumulators + act-dtype
    # activations, and the (1, tile_b) output double buffer.
    per_row = (2 * im_dim * x_bytes
               + (im_dim * 2 if x_bytes > 2 else 0)
               + (h1 + h2 + h3) * (4 + act_bytes)
               + 2 * 4)

    if tile_b is None:
        tile_b = _choose_tile_b(B, per_row, usable - weight_bytes - headroom,
                                num_tc)
    else:
        assert tile_b >= 1 and (tile_b >= B or tile_b % 8 == 0), \
            "explicit tile_b must cover the batch or be a multiple of 8"

    steps = pl.cdiv(B, tile_b)
    B_out = steps * tile_b      # only the OUTPUT is padded; x is never copied.

    vmem_needed = weight_bytes + tile_b * per_row + headroom
    vmem_limit = int(min(max(vmem_needed, 16 * 2**20), usable))

    # x block spec.  On single-TC chips with long grids (x-DMA-bound regime on
    # v6e) deepen the x pipeline to 3 buffers if VMEM allows.
    x_spec = pl.BlockSpec((tile_b, im_dim), lambda i: (i, 0))
    if (num_tc == 1 and steps >= 4
            and vmem_needed + tile_b * im_dim * x_bytes <= usable):
        try:
            x_spec = pl.BlockSpec((tile_b, im_dim), lambda i: (i, 0),
                                  pipeline_mode=pl.Buffered(3))
            vmem_limit = int(min(vmem_limit + tile_b * im_dim * x_bytes,
                                 usable))
        except TypeError:
            pass  # older jax: fall back to default double buffering

    # Weights/biases: whole array resident in VMEM, single copy (constant
    # block index -> no double buffering needed).
    resident = pl.BlockSpec(memory_space=pltpu.MemorySpace.VMEM)
    in_specs = [x_spec] + [resident] * 8
    # Lane-dense logits row: block (1, tile_b) of a (1, B_out) output.
    out_specs = pl.BlockSpec((1, tile_b), lambda i: (0, i))

    flops = 2 * B_out * (im_dim * h1 + h1 * h2 + h2 * h3 + h3)
    bytes_accessed = B * im_dim * x_bytes + B_out * 4 + weight_bytes

    out_row = pl.pallas_call(
        _make_kernel(act_dtype),
        out_shape=jax.ShapeDtypeStruct((1, B_out), jnp.float32),
        grid=(steps,),
        in_specs=in_specs,
        out_specs=out_specs,
        compiler_params=pltpu.CompilerParams(
            dimension_semantics=("parallel",),
            vmem_limit_bytes=vmem_limit),
        cost_estimate=pl.CostEstimate(
            flops=flops, transcendentals=0, bytes_accessed=bytes_accessed),
    )(x, w1b, b1a, w2b, b2a, w3b, b3a, w4_row, b4f)

    return out_row[0, :B].reshape(B, 1)


# ---------------------------------------------------------------------------
# Params + references
# ---------------------------------------------------------------------------
def init_params(key, im_dim, hidden_dim):
    """Synthetic init. Weights stored pre-transposed as (in, out) so
    y = x @ W + b; biases shape (out,)."""
    dims = [im_dim, hidden_dim * 4, hidden_dim * 2, hidden_dim, 1]
    params = []
    for i in range(4):
        key, kw, kb = jax.random.split(key, 3)
        std = float(dims[i]) ** -0.5
        w = std * jax.random.normal(kw, (dims[i], dims[i + 1]), jnp.float32)
        b = 0.1 * jax.random.normal(kb, (dims[i + 1],), jnp.float32)
        params.append((w, b))
    return params


def reference_forward_matched(x, params, act_dtype):
    """Pure-JAX reference mirroring the kernel's exact numerics
    (bf16 matmuls, f32 accumulation, act_dtype bias+LeakyReLU)."""
    bf16 = jnp.bfloat16
    (w1, b1), (w2, b2), (w3, b3), (w4, b4) = params

    def layer(h, w, b):
        acc = jnp.dot(h, w.astype(bf16), preferred_element_type=jnp.float32)
        return _leaky_relu(acc.astype(act_dtype)
                           + b.reshape(1, -1).astype(act_dtype)).astype(bf16)

    h = x.astype(bf16)
    h = layer(h, w1, b1)
    h = layer(h, w2, b2)
    h = layer(h, w3, b3)
    w4_row = w4.reshape(1, -1).astype(bf16)
    logits = lax.dot_general(w4_row, h,
                             dimension_numbers=(((1,), (1,)), ((), ())),
                             preferred_element_type=jnp.float32)
    logits = logits + b4.reshape(1, -1).astype(jnp.float32)
    return logits.reshape(-1, 1)


def reference_forward_f32(x, params):
    (w1, b1), (w2, b2), (w3, b3), (w4, b4) = params
    h = _leaky_relu(x @ w1 + b1.reshape(1, -1))
    h = _leaky_relu(h @ w2 + b2.reshape(1, -1))
    h = _leaky_relu(h @ w3 + b3.reshape(1, -1))
    return h @ w4 + b4.reshape(1, -1)


if __name__ == "__main__":
    # Small shapes consistent with a flattened-image MLP discriminator
    # (module defaults are im_dim=784, hidden=128; scaled down here).
    IM_DIM, HIDDEN = 128, 32

    key = jax.random.PRNGKey(0)
    key, k1, k2 = jax.random.split(key, 3)
    params = init_params(key, IM_DIM, HIDDEN)
    act_dtype = _default_act_dtype()

    # Case 1: non-tile-aligned batch -> exercises the no-pad partial-block path.
    B1 = 200
    x1 = jax.random.normal(k1, (B1, IM_DIM), jnp.float32)
    out1 = jax.block_until_ready(
        discriminator_forward(x1, params, act_dtype=act_dtype))
    ref1 = reference_forward_matched(x1, params, act_dtype)
    ref1_f32 = reference_forward_f32(x1, params)
    assert out1.shape == (B1, 1)
    assert jnp.allclose(out1, ref1, atol=1e-2, rtol=5e-2), \
        "mismatch vs matched (bf16) reference"
    assert jnp.allclose(out1, ref1_f32, atol=6e-2, rtol=2e-1), \
        "mismatch vs f32 reference"

    # Case 2: aligned batch streamed as bf16 (halves x HBM traffic).
    B2 = 256
    x2 = jax.random.normal(k2, (B2, IM_DIM), jnp.float32)
    out2 = jax.block_until_ready(
        discriminator_forward(x2.astype(jnp.bfloat16), params,
                              act_dtype=act_dtype))
    ref2 = reference_forward_matched(x2, params, act_dtype)
    assert out2.shape == (B2, 1)
    assert jnp.allclose(out2, ref2, atol=1e-2, rtol=5e-2), \
        "mismatch (bf16 x) vs matched reference"

    print("KERNEL_OK")
</pallas_src>

<mosaic_0001>
module attributes {stable_mosaic.version = 11 : i64} {
  func.func @disc_mlp_kernel(%arg0: i32, %arg1: memref<128x128xf32, #tpu.memory_space<vmem>>, %arg2: memref<128x128xbf16, #tpu.memory_space<vmem>>, %arg3: memref<1x128xbf16, #tpu.memory_space<vmem>>, %arg4: memref<128x64xbf16, #tpu.memory_space<vmem>>, %arg5: memref<1x64xbf16, #tpu.memory_space<vmem>>, %arg6: memref<64x32xbf16, #tpu.memory_space<vmem>>, %arg7: memref<1x32xbf16, #tpu.memory_space<vmem>>, %arg8: memref<1x32xbf16, #tpu.memory_space<vmem>>, %arg9: memref<1x1xf32, #tpu.memory_space<vmem>>, %arg10: memref<1x128xf32, #tpu.memory_space<vmem>>) attributes {dimension_semantics = [#tpu.dimension_semantics<parallel>], iteration_bounds = array<i64: 2>, scalar_prefetch = 0 : i64, scratch_operands = 0 : i64, tpu.core_type = #tpu.core_type<tc>, window_params = [{transform_indices = @transform_0, window_bounds = array<i64: 128, 128>}, {pipeline_mode = #tpu.pipeline_mode<synchronous>, transform_indices = @transform_1, window_bounds = array<i64: 128, 128>}, {pipeline_mode = #tpu.pipeline_mode<synchronous>, transform_indices = @transform_2, window_bounds = array<i64: 1, 128>}, {pipeline_mode = #tpu.pipeline_mode<synchronous>, transform_indices = @transform_3, window_bounds = array<i64: 128, 64>}, {pipeline_mode = #tpu.pipeline_mode<synchronous>, transform_indices = @transform_4, window_bounds = array<i64: 1, 64>}, {pipeline_mode = #tpu.pipeline_mode<synchronous>, transform_indices = @transform_5, window_bounds = array<i64: 64, 32>}, {pipeline_mode = #tpu.pipeline_mode<synchronous>, transform_indices = @transform_6, window_bounds = array<i64: 1, 32>}, {pipeline_mode = #tpu.pipeline_mode<synchronous>, transform_indices = @transform_7, window_bounds = array<i64: 1, 32>}, {pipeline_mode = #tpu.pipeline_mode<synchronous>, transform_indices = @transform_8, window_bounds = array<i64: 1, 1>}, {transform_indices = @transform_9, window_bounds = array<i64: 1, 128>}]} {
    %c0 = arith.constant 0 : index
    %c0_0 = arith.constant 0 : index
    %0 = vector.load %arg1[%c0, %c0_0] : memref<128x128xf32, #tpu.memory_space<vmem>>, vector<128x128xf32>
    %1 = arith.truncf %0 : vector<128x128xf32> to vector<128x128xbf16>
    %c0_1 = arith.constant 0 : index
    %c0_2 = arith.constant 0 : index
    %2 = vector.load %arg2[%c0_1, %c0_2] : memref<128x128xbf16, #tpu.memory_space<vmem>>, vector<128x128xbf16>
    %cst = arith.constant dense<0.000000e+00> : vector<128x128xf32>
    %3 = tpu.matmul %1, %2, %cst {dimension_numbers = #tpu.dot_dimension_numbers<[1], [0], [0], [1], [0, 0, 1, 1], [], []>} : vector<128x128xbf16>, vector<128x128xbf16>, vector<128x128xf32> -> vector<128x128xf32>
    %4 = arith.truncf %3 : vector<128x128xf32> to vector<128x128xbf16>
    %c0_3 = arith.constant 0 : index
    %c0_4 = arith.constant 0 : index
    %5 = vector.load %arg3[%c0_3, %c0_4] : memref<1x128xbf16, #tpu.memory_space<vmem>>, vector<1x128xbf16>
    %6 = vector.broadcast %5 : vector<1x128xbf16> to vector<128x128xbf16>
    %7 = arith.addf %4, %6 : vector<128x128xbf16>
    %cst_5 = arith.constant 0.000000e+00 : bf16
    %8 = vector.broadcast %cst_5 : bf16 to vector<128x128xbf16>
    %9 = arith.cmpf oge, %7, %8 : vector<128x128xbf16>
    %cst_6 = arith.constant 2.001950e-01 : bf16
    %10 = vector.broadcast %cst_6 : bf16 to vector<128x128xbf16>
    %11 = arith.mulf %10, %7 : vector<128x128xbf16>
    %12 = arith.select %9, %7, %11 : vector<128x128xi1>, vector<128x128xbf16>
    %c0_7 = arith.constant 0 : index
    %c0_8 = arith.constant 0 : index
    %13 = vector.load %arg4[%c0_7, %c0_8] : memref<128x64xbf16, #tpu.memory_space<vmem>>, vector<128x64xbf16>
    %cst_9 = arith.constant dense<0.000000e+00> : vector<128x64xf32>
    %14 = tpu.matmul %12, %13, %cst_9 {dimension_numbers = #tpu.dot_dimension_numbers<[1], [0], [0], [1], [0, 0, 1, 1], [], []>} : vector<128x128xbf16>, vector<128x64xbf16>, vector<128x64xf32> -> vector<128x64xf32>
    %15 = arith.truncf %14 : vector<128x64xf32> to vector<128x64xbf16>
    %c0_10 = arith.constant 0 : index
    %c0_11 = arith.constant 0 : index
    %16 = vector.load %arg5[%c0_10, %c0_11] : memref<1x64xbf16, #tpu.memory_space<vmem>>, vector<1x64xbf16>
    %17 = vector.broadcast %16 : vector<1x64xbf16> to vector<128x64xbf16>
    %18 = arith.addf %15, %17 : vector<128x64xbf16>
    %cst_12 = arith.constant 0.000000e+00 : bf16
    %19 = vector.broadcast %cst_12 : bf16 to vector<128x64xbf16>
    %20 = arith.cmpf oge, %18, %19 : vector<128x64xbf16>
    %cst_13 = arith.constant 2.001950e-01 : bf16
    %21 = vector.broadcast %cst_13 : bf16 to vector<128x64xbf16>
    %22 = arith.mulf %21, %18 : vector<128x64xbf16>
    %23 = arith.select %20, %18, %22 : vector<128x64xi1>, vector<128x64xbf16>
    %c0_14 = arith.constant 0 : index
    %c0_15 = arith.constant 0 : index
    %24 = vector.load %arg6[%c0_14, %c0_15] : memref<64x32xbf16, #tpu.memory_space<vmem>>, vector<64x32xbf16>
    %cst_16 = arith.constant dense<0.000000e+00> : vector<128x32xf32>
    %25 = tpu.matmul %23, %24, %cst_16 {dimension_numbers = #tpu.dot_dimension_numbers<[1], [0], [0], [1], [0, 0, 1, 1], [], []>} : vector<128x64xbf16>, vector<64x32xbf16>, vector<128x32xf32> -> vector<128x32xf32>
    %26 = arith.truncf %25 : vector<128x32xf32> to vector<128x32xbf16>
    %c0_17 = arith.constant 0 : index
    %c0_18 = arith.constant 0 : index
    %27 = vector.load %arg7[%c0_17, %c0_18] : memref<1x32xbf16, #tpu.memory_space<vmem>>, vector<1x32xbf16>
    %28 = vector.broadcast %27 : vector<1x32xbf16> to vector<128x32xbf16>
    %29 = arith.addf %26, %28 : vector<128x32xbf16>
    %cst_19 = arith.constant 0.000000e+00 : bf16
    %30 = vector.broadcast %cst_19 : bf16 to vector<128x32xbf16>
    %31 = arith.cmpf oge, %29, %30 : vector<128x32xbf16>
    %cst_20 = arith.constant 2.001950e-01 : bf16
    %32 = vector.broadcast %cst_20 : bf16 to vector<128x32xbf16>
    %33 = arith.mulf %32, %29 : vector<128x32xbf16>
    %34 = arith.select %31, %29, %33 : vector<128x32xi1>, vector<128x32xbf16>
    %c0_21 = arith.constant 0 : index
    %c0_22 = arith.constant 0 : index
    %35 = vector.load %arg8[%c0_21, %c0_22] : memref<1x32xbf16, #tpu.memory_space<vmem>>, vector<1x32xbf16>
    %cst_23 = arith.constant dense<0.000000e+00> : vector<1x128xf32>
    %36 = tpu.matmul %35, %34, %cst_23 {dimension_numbers = #tpu.dot_dimension_numbers<[1], [1], [0], [0], [0, 0, 1, 0], [], []>} : vector<1x32xbf16>, vector<128x32xbf16>, vector<1x128xf32> -> vector<1x128xf32>
    %c0_24 = arith.constant 0 : index
    %c0_25 = arith.constant 0 : index
    %37 = vector.load %arg9[%c0_24, %c0_25] : memref<1x1xf32, #tpu.memory_space<vmem>>, vector<1x1xf32>
    %38 = vector.broadcast %37 : vector<1x1xf32> to vector<1x128xf32>
    %39 = arith.addf %36, %38 : vector<1x128xf32>
    %c0_26 = arith.constant 0 : index
    %c0_27 = arith.constant 0 : index
    %40 = vector.load %arg10[%c0_26, %c0_27] : memref<1x128xf32, #tpu.memory_space<vmem>>, vector<1x128xf32>
    tpu.vector_store %arg10[%c0_26, %c0_27], %39 {strides = array<i32>} : memref<1x128xf32, #tpu.memory_space<vmem>>, vector<1x128xf32>,
    return
  }
  func.func @transform_0(%arg0: i32) -> (i32, i32) {
    %c0_i32 = arith.constant 0 : i32
    %c0_i32_0 = arith.constant 0 : i32
    return %arg0, %c0_i32 : i32, i32
  }
  func.func @transform_1(%arg0: i32) -> (i32, i32) {
    %c0_i32 = arith.constant 0 : i32
    %c0_i32_0 = arith.constant 0 : i32
    %c0_i32_1 = arith.constant 0 : i32
    return %c0_i32, %c0_i32_0 : i32, i32
  }
  func.func @transform_2(%arg0: i32) -> (i32, i32) {
    %c0_i32 = arith.constant 0 : i32
    %c0_i32_0 = arith.constant 0 : i32
    %c0_i32_1 = arith.constant 0 : i32
    return %c0_i32, %c0_i32_0 : i32, i32
  }
  func.func @transform_3(%arg0: i32) -> (i32, i32) {
    %c0_i32 = arith.constant 0 : i32
    %c0_i32_0 = arith.constant 0 : i32
    %c0_i32_1 = arith.constant 0 : i32
    return %c0_i32, %c0_i32_0 : i32, i32
  }
  func.func @transform_4(%arg0: i32) -> (i32, i32) {
    %c0_i32 = arith.constant 0 : i32
    %c0_i32_0 = arith.constant 0 : i32
    %c0_i32_1 = arith.constant 0 : i32
    return %c0_i32, %c0_i32_0 : i32, i32
  }
  func.func @transform_5(%arg0: i32) -> (i32, i32) {
    %c0_i32 = arith.constant 0 : i32
    %c0_i32_0 = arith.constant 0 : i32
    %c0_i32_1 = arith.constant 0 : i32
    return %c0_i32, %c0_i32_0 : i32, i32
  }
  func.func @transform_6(%arg0: i32) -> (i32, i32) {
    %c0_i32 = arith.constant 0 : i32
    %c0_i32_0 = arith.constant 0 : i32
    %c0_i32_1 = arith.constant 0 : i32
    return %c0_i32, %c0_i32_0 : i32, i32
  }
  func.func @transform_7(%arg0: i32) -> (i32, i32) {
    %c0_i32 = arith.constant 0 : i32
    %c0_i32_0 = arith.constant 0 : i32
    %c0_i32_1 = arith.constant 0 : i32
    return %c0_i32, %c0_i32_0 : i32, i32
  }
  func.func @transform_8(%arg0: i32) -> (i32, i32) {
    %c0_i32 = arith.constant 0 : i32
    %c0_i32_0 = arith.constant 0 : i32
    %c0_i32_1 = arith.constant 0 : i32
    return %c0_i32, %c0_i32_0 : i32, i32
  }
  func.func @transform_9(%arg0: i32) -> (i32, i32) {
    %c0_i32 = arith.constant 0 : i32
    %c0_i32_0 = arith.constant 0 : i32
    return %c0_i32, %arg0 : i32, i32
  }
}

</mosaic_0001>

<llo_original>
// kernel: tpu_custom_call.1
$region0: #{tpu_custom_call.1}
  #allocation0 [shape = 'u32[]', space=smem, size = 0x4, offset = 0x4, fixed_abs, tag = 'smem constant byte address 0x4 - core index']
  #allocation1 [shape = 'u32[144,128]{1,0:T(1,128)}', space=vmem, size = 0x12000, scoped, tag = 'internal scratch']
  #allocation2 [shape = 'f32[1,1]{1,0:T(1,128)S(1)}', space=vmem, size = 0x200, scoped, tag = 'scoped memory for tpu_custom_call.1']
  %s0 = inlined_call_operand.hbm [shape: f32[200,128], index: 0, kind: input, shape index: {}]
  %s1 = inlined_call_operand.vmem [shape: bf16[128,128], index: 1, kind: input, shape index: {}]
  %s2 = inlined_call_operand.vmem [shape: bf16[1,128], index: 2, kind: input, shape index: {}]
  %s3 = inlined_call_operand.vmem [shape: bf16[128,64], index: 3, kind: input, shape index: {}]
  %s4 = inlined_call_operand.vmem [shape: bf16[1,64], index: 4, kind: input, shape index: {}]
  %s5 = inlined_call_operand.vmem [shape: bf16[64,32], index: 5, kind: input, shape index: {}]
  %s6 = inlined_call_operand.vmem [shape: bf16[1,32], index: 6, kind: input, shape index: {}]
  %s7 = inlined_call_operand.vmem [shape: bf16[1,32], index: 7, kind: input, shape index: {}]
  %s8 = inlined_call_operand.<no memory space> [shape: f32[1,1], index: 8, kind: input, shape index: {}]
  %s9 = inlined_call_operand.hbm [shape: f32[1,256], index: 9, kind: output, shape index: {}]
  %s10 = sld [smem:[#allocation0]]
  $region73: #{tpu_custom_call.1} parent=0
    _
  %s12 = ssub.s32 1, %s10
  %s13 = scalar_select 0, %s12, %s10
  %v14 = vstv %s8
  %15 = vst [vmem:[#allocation2] sm:$0x1] %v14
  $region1: #{tpu_custom_call.1} parent=0
    #allocation3 [shape = 'u8[131072]{0}', space=vmem, size = 0x20000, scoped, tag = 'input window, operand 0']
    #allocation4 [shape = 's32[2]{0}', space=sflag, size = 0x8, scoped, tag = 'scoped memory for tpu_custom_call.1']
    #allocation5 [shape = 's32[2]{0}', space=sflag, size = 0x8, scoped, tag = 'scoped memory for tpu_custom_call.1']
    #allocation6 [shape = 'u8[1024]{0}', space=vmem, size = 0x400, scoped, tag = 'output window, operand 0']
    %16 = vsyncpa [#allocation4], 0
    %s17 = scalar_lea.sflag [#allocation4], 1
    %18 = vsyncpa %s17, 0
    %19 = vsyncpa [#allocation5], 0
    %s20 = scalar_lea.sflag [#allocation5], 1
    %21 = vsyncpa %s20, 0
    loop: start=0, step=1, limit=4
    $region2: #{tpu_custom_call.1} parent=1 // loop_pre_header
      _
    $region3: #{tpu_custom_call.1} parent=1 // loop_header
      %s23 = sphi 0, %s27
      %p24 = scmp.ge.s32.totalorder %s23, 4
      %s33 = sphi 0, %s35
      %s36 = sphi 0, %s33
      %s37 = sphi 0, %s36
      %s53 = sphi 0, %s37
      %s57 = sphi 0, %s57
      %s59 = sphi 0, %s57
      %s60 = sphi 0, %s59
      %s74 = sphi 0, %s60
      %s78 = sphi 0, %s78
      %s80 = sphi 0, %s78
      %s81 = sphi 0, %s80
      %s95 = sphi 0, %s81
      %s99 = sphi 0, %s99
      %s101 = sphi 0, %s99
      %s102 = sphi 0, %s101
      %s116 = sphi 0, %s102
      %s120 = sphi 0, %s120
      %s122 = sphi 0, %s120
      %s123 = sphi 0, %s122
      %s137 = sphi 0, %s123
      %s141 = sphi 0, %s141
      %s143 = sphi 0, %s141
      %s144 = sphi 0, %s143
      %s158 = sphi 0, %s144
      %s162 = sphi 0, %s162
      %s164 = sphi 0, %s162
      %s165 = sphi 0, %s164
      %s179 = sphi 0, %s165
      %s183 = sphi 0, %s183
      %s185 = sphi 0, %s183
      %s186 = sphi 0, %s185
      %s200 = sphi 0, %s186
      %s204 = sphi 0, %s204
      %s206 = sphi 0, %s204
      %s207 = sphi 0, %s206
      %s221 = sphi 0, %s207
      %s227 = sphi 0, %s229
      %s230 = sphi 0, %s227
      %s231 = sphi 0, %s230
      %s247 = sphi 0, %s231
    $region4: #{tpu_custom_call.1} parent=1 // loop_header_branch
      %26 = sbr.rel (%p24) target = $region8
    $region5: #{tpu_custom_call.1} parent=1 // loop_body
      %s28 = ssub.s32 %s23, 1
      %s29 = ssub.s32 %s23, 2
      %s30 = sadd.s32 %s23, 1
      %s31 = ssub.s32 %s23, %s30
      %p32 = scmp.eq.s32.totalorder %s31, 0
      %s34 = sadd.s32 %s33, 1
      %s35 = scalar_select %p32, %s33, %s34
      %p38 = pneg %p32
      %p39 = scmp.eq.s32.totalorder %s23, 1
      %p40 = por %p38, %p39
      %p41 = scmp.ne.s32.totalorder %s33, %s36
      %p42 = scmp.eq.s32.totalorder %s23, 0
      %p43 = por %p41, %p42
      %p44 = scmp.ne.s32.totalorder %s33, %s36
      %p45 = scmp.eq.s32.totalorder %s28, 1
      %p46 = por %p44, %p45
      %p47 = scmp.ne.s32.totalorder %s36, %s37
      %p48 = scmp.eq.s32.totalorder %s28, 0
      %p49 = por %p47, %p48
      %p50 = scmp.ne.s32.totalorder %s36, %s37
      %p51 = scmp.eq.s32.totalorder %s29, 1
      %p52 = por %p50, %p51
      %p54 = scmp.ne.s32.totalorder %s37, %s53
      %p55 = scmp.eq.s32.totalorder %s29, 0
      %p56 = por %p54, %p55
      %s58 = sadd.s32 %s57, 1
      %p61 = scmp.eq.s32.totalorder %s23, 1
      %p62 = scmp.ne.s32.totalorder %s57, %s59
      %p63 = scmp.eq.s32.totalorder %s23, 0
      %p64 = por %p62, %p63
      %p65 = scmp.ne.s32.totalorder %s57, %s59
      %p66 = scmp.eq.s32.totalorder %s28, 1
      %p67 = por %p65, %p66
      %p68 = scmp.ne.s32.totalorder %s59, %s60
      %p69 = scmp.eq.s32.totalorder %s28, 0
      %p70 = por %p68, %p69
      %p71 = scmp.ne.s32.totalorder %s59, %s60
      %p72 = scmp.eq.s32.totalorder %s29, 1
      %p73 = por %p71, %p72
      %p75 = scmp.ne.s32.totalorder %s60, %s74
      %p76 = scmp.eq.s32.totalorder %s29, 0
      %p77 = por %p75, %p76
      %s79 = sadd.s32 %s78, 1
      %p82 = scmp.eq.s32.totalorder %s23, 1
      %p83 = scmp.ne.s32.totalorder %s78, %s80
      %p84 = scmp.eq.s32.totalorder %s23, 0
      %p85 = por %p83, %p84
      %p86 = scmp.ne.s32.totalorder %s78, %s80
      %p87 = scmp.eq.s32.totalorder %s28, 1
      %p88 = por %p86, %p87
      %p89 = scmp.ne.s32.totalorder %s80, %s81
      %p90 = scmp.eq.s32.totalorder %s28, 0
      %p91 = por %p89, %p90
      %p92 = scmp.ne.s32.totalorder %s80, %s81
      %p93 = scmp.eq.s32.totalorder %s29, 1
      %p94 = por %p92, %p93
      %p96 = scmp.ne.s32.totalorder %s81, %s95
      %p97 = scmp.eq.s32.totalorder %s29, 0
      %p98 = por %p96, %p97
      %s100 = sadd.s32 %s99, 1
      %p103 = scmp.eq.s32.totalorder %s23, 1
      %p104 = scmp.ne.s32.totalorder %s99, %s101
      %p105 = scmp.eq.s32.totalorder %s23, 0
      %p106 = por %p104, %p105
      %p107 = scmp.ne.s32.totalorder %s99, %s101
      %p108 = scmp.eq.s32.totalorder %s28, 1
      %p109 = por %p107, %p108
      %p110 = scmp.ne.s32.totalorder %s101, %s102
      %p111 = scmp.eq.s32.totalorder %s28, 0
      %p112 = por %p110, %p111
      %p113 = scmp.ne.s32.totalorder %s101, %s102
      %p114 = scmp.eq.s32.totalorder %s29, 1
      %p115 = por %p113, %p114
      %p117 = scmp.ne.s32.totalorder %s102, %s116
      %p118 = scmp.eq.s32.totalorder %s29, 0
      %p119 = por %p117, %p118
      %s121 = sadd.s32 %s120, 1
      %p124 = scmp.eq.s32.totalorder %s23, 1
      %p125 = scmp.ne.s32.totalorder %s120, %s122
      %p126 = scmp.eq.s32.totalorder %s23, 0
      %p127 = por %p125, %p126
      %p128 = scmp.ne.s32.totalorder %s120, %s122
      %p129 = scmp.eq.s32.totalorder %s28, 1
      %p130 = por %p128, %p129
      %p131 = scmp.ne.s32.totalorder %s122, %s123
      %p132 = scmp.eq.s32.totalorder %s28, 0
      %p133 = por %p131, %p132
      %p134 = scmp.ne.s32.totalorder %s122, %s123
      %p135 = scmp.eq.s32.totalorder %s29, 1
      %p136 = por %p134, %p135
      %p138 = scmp.ne.s32.totalorder %s123, %s137
      %p139 = scmp.eq.s32.totalorder %s29, 0
      %p140 = por %p138, %p139
      %s142 = sadd.s32 %s141, 1
      %p145 = scmp.eq.s32.totalorder %s23, 1
      %p146 = scmp.ne.s32.totalorder %s141, %s143
      %p147 = scmp.eq.s32.totalorder %s23, 0
      %p148 = por %p146, %p147
      %p149 = scmp.ne.s32.totalorder %s141, %s143
      %p150 = scmp.eq.s32.totalorder %s28, 1
      %p151 = por %p149, %p150
      %p152 = scmp.ne.s32.totalorder %s143, %s144
      %p153 = scmp.eq.s32.totalorder %s28, 0
      %p154 = por %p152, %p153
      %p155 = scmp.ne.s32.totalorder %s143, %s144
      %p156 = scmp.eq.s32.totalorder %s29, 1
      %p157 = por %p155, %p156
      %p159 = scmp.ne.s32.totalorder %s144, %s158
      %p160 = scmp.eq.s32.totalorder %s29, 0
      %p161 = por %p159, %p160
      %s163 = sadd.s32 %s162, 1
      %p166 = scmp.eq.s32.totalorder %s23, 1
      %p167 = scmp.ne.s32.totalorder %s162, %s164
      %p168 = scmp.eq.s32.totalorder %s23, 0
      %p169 = por %p167, %p168
      %p170 = scmp.ne.s32.totalorder %s162, %s164
      %p171 = scmp.eq.s32.totalorder %s28, 1
      %p172 = por %p170, %p171
      %p173 = scmp.ne.s32.totalorder %s164, %s165
      %p174 = scmp.eq.s32.totalorder %s28, 0
      %p175 = por %p173, %p174
      %p176 = scmp.ne.s32.totalorder %s164, %s165
      %p177 = scmp.eq.s32.totalorder %s29, 1
      %p178 = por %p176, %p177
      %p180 = scmp.ne.s32.totalorder %s165, %s179
      %p181 = scmp.eq.s32.totalorder %s29, 0
      %p182 = por %p180, %p181
      %s184 = sadd.s32 %s183, 1
      %p187 = scmp.eq.s32.totalorder %s23, 1
      %p188 = scmp.ne.s32.totalorder %s183, %s185
      %p189 = scmp.eq.s32.totalorder %s23, 0
      %p190 = por %p188, %p189
      %p191 = scmp.ne.s32.totalorder %s183, %s185
      %p192 = scmp.eq.s32.totalorder %s28, 1
      %p193 = por %p191, %p192
      %p194 = scmp.ne.s32.totalorder %s185, %s186
      %p195 = scmp.eq.s32.totalorder %s28, 0
      %p196 = por %p194, %p195
      %p197 = scmp.ne.s32.totalorder %s185, %s186
      %p198 = scmp.eq.s32.totalorder %s29, 1
      %p199 = por %p197, %p198
      %p201 = scmp.ne.s32.totalorder %s186, %s200
      %p202 = scmp.eq.s32.totalorder %s29, 0
      %p203 = por %p201, %p202
      %s205 = sadd.s32 %s204, 1
      %p208 = scmp.eq.s32.totalorder %s23, 1
      %p209 = scmp.ne.s32.totalorder %s204, %s206
      %p210 = scmp.eq.s32.totalorder %s23, 0
      %p211 = por %p209, %p210
      %p212 = scmp.ne.s32.totalorder %s204, %s206
      %p213 = scmp.eq.s32.totalorder %s28, 1
      %p214 = por %p212, %p213
      %p215 = scmp.ne.s32.totalorder %s206, %s207
      %p216 = scmp.eq.s32.totalorder %s28, 0
      %p217 = por %p215, %p216
      %p218 = scmp.ne.s32.totalorder %s206, %s207
      %p219 = scmp.eq.s32.totalorder %s29, 1
      %p220 = por %p218, %p219
      %p222 = scmp.ne.s32.totalorder %s207, %s221
      %p223 = scmp.eq.s32.totalorder %s29, 0
      %p224 = por %p222, %p223
      %s225 = ssub.s32 %s23, %s30
      %p226 = scmp.eq.s32.totalorder %s225, 0
      %s228 = sadd.s32 %s227, 1
      %s229 = scalar_select %p226, %s227, %s228
      %p232 = pneg %p226
      %p233 = scmp.eq.s32.totalorder %s23, 1
      %p234 = por %p232, %p233
      %p235 = scmp.ne.s32.totalorder %s227, %s230
      %p236 = scmp.eq.s32.totalorder %s23, 0
      %p237 = por %p235, %p236
      %p238 = scmp.ne.s32.totalorder %s227, %s230
      %p239 = scmp.eq.s32.totalorder %s28, 1
      %p240 = por %p238, %p239
      %p241 = scmp.ne.s32.totalorder %s230, %s231
      %p242 = scmp.eq.s32.totalorder %s28, 0
      %p243 = por %p241, %p242
      %p244 = scmp.ne.s32.totalorder %s230, %s231
      %p245 = scmp.eq.s32.totalorder %s29, 1
      %p246 = por %p244, %p245
      %p248 = scmp.ne.s32.totalorder %s231, %s247
      %p249 = scmp.eq.s32.totalorder %s29, 0
      %p250 = por %p248, %p249
      %p251 = scmp.le.s32.totalorder 1, %s23
      %p252 = scmp.lt.s32.totalorder %s23, 3
      %p253 = pnand %p251, %p252
      %p254 = pneg %p253
      // Predicated region
      $region9: #{tpu_custom_call.1} parent=5 // pred_check
        _
      $region10: #{tpu_custom_call.1} parent=5 // pred_check_branch
        %256 = sbr.rel (%p253) target = $region12
      $region11: #{tpu_custom_call.1} parent=5 // pred_region
        %s257 = ssub.s32 %s23, 1
        // Predicated region
        $region13: #{tpu_custom_call.1} parent=11 // pred_check
          %p258 = pneg %p70
        $region14: #{tpu_custom_call.1} parent=11 // pred_check_branch
          %260 = sbr.rel (%p258) target = $region16
        $region15: #{tpu_custom_call.1} parent=11 // pred_region
          _
        $region16: #{tpu_custom_call.1} parent=11 // pred_fallthru
          _
        // Predicated region
        $region17: #{tpu_custom_call.1} parent=11 // pred_check
          %p261 = pneg %p91
        $region18: #{tpu_custom_call.1} parent=11 // pred_check_branch
          %263 = sbr.rel (%p261) target = $region20
        $region19: #{tpu_custom_call.1} parent=11 // pred_region
          _
        $region20: #{tpu_custom_call.1} parent=11 // pred_fallthru
          _
        // Predicated region
        $region21: #{tpu_custom_call.1} parent=11 // pred_check
          %p264 = pneg %p112
        $region22: #{tpu_custom_call.1} parent=11 // pred_check_branch
          %266 = sbr.rel (%p264) target = $region24
        $region23: #{tpu_custom_call.1} parent=11 // pred_region
          _
        $region24: #{tpu_custom_call.1} parent=11 // pred_fallthru
          _
        // Predicated region
        $region25: #{tpu_custom_call.1} parent=11 // pred_check
          %p267 = pneg %p133
        $region26: #{tpu_custom_call.1} parent=11 // pred_check_branch
          %269 = sbr.rel (%p267) target = $region28
        $region27: #{tpu_custom_call.1} parent=11 // pred_region
          _
        $region28: #{tpu_custom_call.1} parent=11 // pred_fallthru
          _
        // Predicated region
        $region29: #{tpu_custom_call.1} parent=11 // pred_check
          %p270 = pneg %p154
        $region30: #{tpu_custom_call.1} parent=11 // pred_check_branch
          %272 = sbr.rel (%p270) target = $region32
        $region31: #{tpu_custom_call.1} parent=11 // pred_region
          _
        $region32: #{tpu_custom_call.1} parent=11 // pred_fallthru
          _
        // Predicated region
        $region33: #{tpu_custom_call.1} parent=11 // pred_check
          %p273 = pneg %p175
        $region34: #{tpu_custom_call.1} parent=11 // pred_check_branch
          %275 = sbr.rel (%p273) target = $region36
        $region35: #{tpu_custom_call.1} parent=11 // pred_region
          _
        $region36: #{tpu_custom_call.1} parent=11 // pred_fallthru
          _
        // Predicated region
        $region37: #{tpu_custom_call.1} parent=11 // pred_check
          %p276 = pneg %p196
        $region38: #{tpu_custom_call.1} parent=11 // pred_check_branch
          %278 = sbr.rel (%p276) target = $region40
        $region39: #{tpu_custom_call.1} parent=11 // pred_region
          _
        $region40: #{tpu_custom_call.1} parent=11 // pred_fallthru
          _
        // Predicated region
        $region41: #{tpu_custom_call.1} parent=11 // pred_check
          %p279 = pneg %p217
        $region42: #{tpu_custom_call.1} parent=11 // pred_check_branch
          %281 = sbr.rel (%p279) target = $region44
        $region43: #{tpu_custom_call.1} parent=11 // pred_region
          _
        $region44: #{tpu_custom_call.1} parent=11 // pred_fallthru
          _
      $region12: #{tpu_custom_call.1} parent=5 // pred_fallthru
        _
      %p282 = scmp.lt.s32.totalorder %s23, 2
      // Predicated region
      $region45: #{tpu_custom_call.1} parent=5 // pred_check
        %p283 = pneg %p282
      $region46: #{tpu_custom_call.1} parent=5 // pred_check_branch
        %285 = sbr.rel (%p283) target = $region48
      $region47: #{tpu_custom_call.1} parent=5 // pred_region
        // Predicated region
        $region49: #{tpu_custom_call.1} parent=47 // pred_check
          %p286 = pneg %p43
        $region50: #{tpu_custom_call.1} parent=47 // pred_check_branch
          %288 = sbr.rel (%p286) target = $region52
        $region51: #{tpu_custom_call.1} parent=47 // pred_region
          %s289 = sand.u32 %s33, 1
          %s290 = scalar_lea.sflag [#allocation4], %s289
          %s291 = sand.u32 %s33, 1
          %s292 = smul.addr %s291, 128
          %s293 = scalar_lea.vmem [#allocation3], %s292
          %s294 = smul.u32 16, %s23
          %s295 = ssub.s32 25, %s294
          %p296 = scmp.lt.s32.totalorder %s295, 16
          %s297 = scalar_select %p296, %s295, 16
          %s298 = smul.u32 128, %s297
          %s300 = ssub.s32 2048, %s298
          %301 = vsyncadd %s290, %s300
          %p302 = scmp.ne.s32.totalorder 0, %s298
          %s303 = smul.addr %s294, 128
          %s304 = scalar_lea.hbm %s0, %s303
          %s305 = smul.u32 8, %s297
          %s306 = sshll.u32 %s293, 4
          %s307 = int_to_ptr.vmem [resolvable:$true] %s306
          %s308 = sshll.u32 %s305, 4
          %312 = dma.hbm_to_vmem [thread:$0]  (%p302), %s304, %s308, %s307, %s290, 128, 128, 8
        $region52: #{tpu_custom_call.1} parent=47 // pred_fallthru
          _
      $region48: #{tpu_custom_call.1} parent=5 // pred_fallthru
        _
      %p313 = scmp.le.s32.totalorder 1, %s23
      %p314 = scmp.lt.s32.totalorder %s23, 3
      %p315 = pnand %p313, %p314
      %p316 = pneg %p315
      // Predicated region
      $region53: #{tpu_custom_call.1} parent=5 // pred_check
        _
      $region54: #{tpu_custom_call.1} parent=5 // pred_check_branch
        %318 = sbr.rel (%p315) target = $region56
      $region55: #{tpu_custom_call.1} parent=5 // pred_region
        %s319 = ssub.s32 %s23, 1
        %s320 = sand.u32 %s36, 1
        %s321 = scalar_lea.sflag [#allocation4], %s320
        %s322 = sand.u32 %s36, 1
        %s323 = smul.addr %s322, 128
        %s324 = scalar_lea.vmem [#allocation3], %s323
        // Predicated region
        $region57: #{tpu_custom_call.1} parent=55 // pred_check
          %p325 = pneg %p49
        $region58: #{tpu_custom_call.1} parent=55 // pred_check_branch
          %327 = sbr.rel (%p325) target = $region60
        $region59: #{tpu_custom_call.1} parent=55 // pred_region
          %328 = dma.done %s321, 2048
        $region60: #{tpu_custom_call.1} parent=55 // pred_fallthru
          _
        %s329 = sand.u32 %s36, 1
        %s330 = scalar_lea.sflag [#allocation4], %s329
        %s331 = sand.u32 %s36, 1
        %s332 = smul.addr %s331, 128
        %s333 = scalar_lea.vmem [#allocation3], %s332
        %p334 = pneg %p49
        %p335 = pneg %p46
        %p336 = pneg %p70
        %p337 = pneg %p67
        %p338 = pneg %p91
        %p339 = pneg %p88
        %p340 = pneg %p112
        %p341 = pneg %p109
        %p342 = pneg %p133
        %p343 = pneg %p130
        %p344 = pneg %p154
        %p345 = pneg %p151
        %p346 = pneg %p175
        %p347 = pneg %p172
        %p348 = pneg %p196
        %p349 = pneg %p193
        %p350 = pneg %p217
        %p351 = pneg %p214
        %p352 = pneg %p243
        %p353 = pneg %p240
        %s354 = sand.u32 %s230, 1
        %s355 = scalar_lea.sflag [#allocation5], %s354
        %s356 = sand.u32 %s230, 1
        %s357 = scalar_lea.vmem [#allocation6], %s356
        %s358 = smul.u32 16, %s28
        %s359 = ssub.s32 25, %s358
        %p360 = scmp.lt.s32.totalorder %s359, 16
        %s361 = scalar_select %p360, %s359, 16
        %s362 = smul.u32 128, %s361
        %v365 = vld [vmem:[%s324] sm:$0xff]
        %v366 = vld [vmem:[%s324 + $0x8] sm:$0xff]
        %v367 = vld [vmem:[%s324 + $0x10] sm:$0xff]
        %v368 = vld [vmem:[%s324 + $0x18] sm:$0xff]
        %v369 = vld [vmem:[%s324 + $0x20] sm:$0xff]
        %v370 = vld [vmem:[%s324 + $0x28] sm:$0xff]
        %v371 = vld [vmem:[%s324 + $0x30] sm:$0xff]
        %v372 = vld [vmem:[%s324 + $0x38] sm:$0xff]
        %v373 = vld [vmem:[%s324 + $0x40] sm:$0xff]
        %v374 = vld [vmem:[%s324 + $0x48] sm:$0xff]
        %v375 = vld [vmem:[%s324 + $0x50] sm:$0xff]
        %v376 = vld [vmem:[%s324 + $0x58] sm:$0xff]
        %v377 = vld [vmem:[%s324 + $0x60] sm:$0xff]
        %v378 = vld [vmem:[%s324 + $0x68] sm:$0xff]
        %v379 = vld [vmem:[%s324 + $0x70] sm:$0xff]
        %v380 = vld [vmem:[%s324 + $0x78] sm:$0xff]
        %v381 = vpack.c.bf16 %v366, %v365
        %v382 = vpack.c.bf16 %v368, %v367
        %v383 = vpack.c.bf16 %v370, %v369
        %v384 = vpack.c.bf16 %v372, %v371
        %v385 = vpack.c.bf16 %v374, %v373
        %v386 = vpack.c.bf16 %v376, %v375
        %v387 = vpack.c.bf16 %v378, %v377
        %v388 = vpack.c.bf16 %v380, %v379
        %v389 = vld [vmem:[%s1] sm:$0xf]
        %v390 = vld [vmem:[%s1 + $0x4] sm:$0xf]
        %v391 = vld [vmem:[%s1 + $0x8] sm:$0xf]
        %v392 = vld [vmem:[%s1 + $0xc] sm:$0xf]
        %v393 = vld [vmem:[%s1 + $0x10] sm:$0xf]
        %v394 = vld [vmem:[%s1 + $0x14] sm:$0xf]
        %v395 = vld [vmem:[%s1 + $0x18] sm:$0xf]
        %v396 = vld [vmem:[%s1 + $0x1c] sm:$0xf]
        %v397 = vld [vmem:[%s1 + $0x20] sm:$0xf]
        %v398 = vld [vmem:[%s1 + $0x24] sm:$0xf]
        %v399 = vld [vmem:[%s1 + $0x28] sm:$0xf]
        %v400 = vld [vmem:[%s1 + $0x2c] sm:$0xf]
        %v401 = vld [vmem:[%s1 + $0x30] sm:$0xf]
        %v402 = vld [vmem:[%s1 + $0x34] sm:$0xf]
        %v403 = vld [vmem:[%s1 + $0x38] sm:$0xf]
        %v404 = vld [vmem:[%s1 + $0x3c] sm:$0xf]
        %v421 = vunpack.c.l.b16 %v389
        %v422 = vunpack.c.l.b16 %v390
        %v423 = vunpack.c.l.b16 %v391
        %v424 = vunpack.c.l.b16 %v392
        %v425 = vunpack.c.l.b16 %v393
        %v426 = vunpack.c.l.b16 %v394
        %v427 = vunpack.c.l.b16 %v395
        %v428 = vunpack.c.l.b16 %v396
        %v429 = vunpack.c.l.b16 %v397
        %v430 = vunpack.c.l.b16 %v398
        %v431 = vunpack.c.l.b16 %v399
        %v432 = vunpack.c.l.b16 %v400
        %v433 = vunpack.c.l.b16 %v401
        %v434 = vunpack.c.l.b16 %v402
        %v435 = vunpack.c.l.b16 %v403
        %v436 = vunpack.c.l.b16 %v404
        %v437 = vpack.c.b16 %v422, %v421
        %v438 = vpack.c.b16 %v424, %v423
        %v439 = vpack.c.b16 %v426, %v425
        %v440 = vpack.c.b16 %v428, %v427
        %v441 = vpack.c.b16 %v430, %v429
        %v442 = vpack.c.b16 %v432, %v431
        %v443 = vpack.c.b16 %v434, %v433
        %v444 = vpack.c.b16 %v436, %v435
        %453 = vmatprep.subr.bf16.mxu0 0
        %454 = vmatpush1.bf16.msra.mxu0 %v437
        %455 = vmatprep.subr.bf16.mxu0 0
        %456 = vmatpush1.bf16.msra.mxu0 %v438
        %457 = vmatprep.subr.bf16.mxu0 0
        %458 = vmatpush1.bf16.msra.mxu0 %v439
        %459 = vmatprep.subr.bf16.mxu0 0
        %460 = vmatpush1.bf16.msra.mxu0 %v440
        %461 = vmatprep.subr.bf16.mxu0 0
        %462 = vmatpush1.bf16.msra.mxu0 %v441
        %463 = vmatprep.subr.bf16.mxu0 0
        %464 = vmatpush1.bf16.msra.mxu0 %v442
        %465 = vmatprep.subr.bf16.mxu0 0
        %466 = vmatpush1.bf16.msra.mxu0 %v443
        %467 = vmatprep.subr.bf16.mxu0 0
        %468 = vmatpush1.bf16.msra.mxu0 %v444
        %469 = vmatprep.subr.bf16.mxu0 0
        %470 = vmatpush1.bf16.msra.mxu0 0
        %471 = vmatprep.subr.bf16.mxu0 0
        %472 = vmatpush1.bf16.msra.mxu0 0
        %473 = vmatprep.subr.bf16.mxu0 0
        %474 = vmatpush1.bf16.msra.mxu0 0
        %475 = vmatprep.subr.bf16.mxu0 0
        %476 = vmatpush1.bf16.msra.mxu0 0
        %477 = vmatprep.subr.bf16.mxu0 0
        %478 = vmatpush1.bf16.msra.mxu0 0
        %479 = vmatprep.subr.bf16.mxu0 0
        %480 = vmatpush1.bf16.msra.mxu0 0
        %481 = vmatprep.subr.bf16.mxu0 0
        %482 = vmatpush1.bf16.msra.mxu0 0
        %483 = vmatprep.subr.bf16.mxu0 0
        %484 = vmatpush1.bf16.msra.mxu0 0
        %485 = vmatprep.mubr.bf16.mxu0 0
        %486 = vmatmul.mubr.bf16.gmra.mrb[0].mxu0 %v381
        %v487 = vpop.f32.mrb[0].mxu0
        %v488 = vadd.f32 0.0, %v487
        %v489 = vpop.f32.mrb[0].mxu0
        %v490 = vpop.f32.mrb[0].mxu0
        %v491 = vadd.f32 0.0, %v490
        %v492 = vpop.f32.mrb[0].mxu0
        %493 = vmatprep.mubr.bf16.mxu0 0
        %494 = vmatmul.mubr.bf16.gmra.mrb[0].mxu0 %v382
        %v495 = vpop.f32.mrb[0].mxu0
        %v496 = vadd.f32 0.0, %v495
        %v497 = vpop.f32.mrb[0].mxu0
        %v498 = vpop.f32.mrb[0].mxu0
        %v499 = vadd.f32 0.0, %v498
        %v500 = vpop.f32.mrb[0].mxu0
        %501 = vmatprep.mubr.bf16.mxu0 0
        %502 = vmatmul.mubr.bf16.gmra.mrb[0].mxu0 %v383
        %v503 = vpop.f32.mrb[0].mxu0
        %v504 = vadd.f32 0.0, %v503
        %v505 = vpop.f32.mrb[0].mxu0
        %v506 = vpop.f32.mrb[0].mxu0
        %v507 = vadd.f32 0.0, %v506
        %v508 = vpop.f32.mrb[0].mxu0
        %509 = vmatprep.mubr.bf16.mxu0 0
        %510 = vmatmul.mubr.bf16.gmra.mrb[0].mxu0 %v384
        %v511 = vpop.f32.mrb[0].mxu0
        %v512 = vadd.f32 0.0, %v511
        %v513 = vpop.f32.mrb[0].mxu0
        %v514 = vpop.f32.mrb[0].mxu0
        %v515 = vadd.f32 0.0, %v514
        %v516 = vpop.f32.mrb[0].mxu0
        %517 = vmatprep.mubr.bf16.mxu0 0
        %518 = vmatmul.mubr.bf16.gmra.mrb[0].mxu0 %v385
        %v519 = vpop.f32.mrb[0].mxu0
        %v520 = vadd.f32 0.0, %v519
        %v521 = vpop.f32.mrb[0].mxu0
        %v522 = vpop.f32.mrb[0].mxu0
        %v523 = vadd.f32 0.0, %v522
        %v524 = vpop.f32.mrb[0].mxu0
        %525 = vmatprep.mubr.bf16.mxu0 0
        %526 = vmatmul.mubr.bf16.gmra.mrb[0].mxu0 %v386
        %v527 = vpop.f32.mrb[0].mxu0
        %v528 = vadd.f32 0.0, %v527
        %v529 = vpop.f32.mrb[0].mxu0
        %v530 = vpop.f32.mrb[0].mxu0
        %v531 = vadd.f32 0.0, %v530
        %v532 = vpop.f32.mrb[0].mxu0
        %533 = vmatprep.mubr.bf16.mxu0 0
        %534 = vmatmul.mubr.bf16.gmra.mrb[0].mxu0 %v387
        %v535 = vpop.f32.mrb[0].mxu0
        %v536 = vadd.f32 0.0, %v535
        %v537 = vpop.f32.mrb[0].mxu0
        %v538 = vpop.f32.mrb[0].mxu0
        %v539 = vadd.f32 0.0, %v538
        %v540 = vpop.f32.mrb[0].mxu0
        %541 = vmatprep.mubr.bf16.mxu0 0
        %542 = vmatmul.mubr.bf16.gmra.mrb[0].mxu0 %v388
        %v543 = vpop.f32.mrb[0].mxu0
        %v544 = vadd.f32 0.0, %v543
        %v545 = vpop.f32.mrb[0].mxu0
        %v546 = vpop.f32.mrb[0].mxu0
        %v547 = vadd.f32 0.0, %v546
        %v548 = vpop.f32.mrb[0].mxu0
        %549 = vdwg.mxu0
        %v550 = vpack.c.bf16 %v491, %v488
        %v551 = vpack.c.bf16 %v499, %v496
        %v552 = vpack.c.bf16 %v507, %v504
        %v553 = vpack.c.bf16 %v515, %v512
        %v554 = vpack.c.bf16 %v523, %v520
        %v555 = vpack.c.bf16 %v531, %v528
        %v556 = vpack.c.bf16 %v539, %v536
        %v557 = vpack.c.bf16 %v547, %v544
        %v558 = vld [vmem:[%s2] sm:$0x1]
        %v560 = vpack.i.b16 %v558, %v558
        %v562 = vlaneseq
        %v563 = vshrl.u32 %v562, 7
        %v564 = vsub.s32 0, %v563
        %v565 = vrot.slane %v560, %v564
        %v566 = vadd.bf16 %v550, %v565
        %v567 = vadd.bf16 %v551, %v565
        %v568 = vadd.bf16 %v552, %v565
        %v569 = vadd.bf16 %v553, %v565
        %v570 = vadd.bf16 %v554, %v565
        %v571 = vadd.bf16 %v555, %v565
        %v572 = vadd.bf16 %v556, %v565
        %v573 = vadd.bf16 %v557, %v565
        %vm574 = vcmp.ge.bf16.partialorder %v566, 0
        %vm575 = vcmp.ge.bf16.partialorder %v567, 0
        %vm576 = vcmp.ge.bf16.partialorder %v568, 0
        %vm577 = vcmp.ge.bf16.partialorder %v569, 0
        %vm578 = vcmp.ge.bf16.partialorder %v570, 0
        %vm579 = vcmp.ge.bf16.partialorder %v571, 0
        %vm580 = vcmp.ge.bf16.partialorder %v572, 0
        %vm581 = vcmp.ge.bf16.partialorder %v573, 0
        %v582 = vmul.bf16 %v566, 1045249613
        %v583 = vmul.bf16 %v567, 1045249613
        %v584 = vmul.bf16 %v568, 1045249613
        %v585 = vmul.bf16 %v569, 1045249613
        %v586 = vmul.bf16 %v570, 1045249613
        %v587 = vmul.bf16 %v571, 1045249613
        %v588 = vmul.bf16 %v572, 1045249613
        %v589 = vmul.bf16 %v573, 1045249613
        %v590 = vsel %vm574, %v566, %v582
        %v591 = vsel %vm575, %v567, %v583
        %v592 = vsel %vm576, %v568, %v584
        %v593 = vsel %vm577, %v569, %v585
        %v594 = vsel %vm578, %v570, %v586
        %v595 = vsel %vm579, %v571, %v587
        %v596 = vsel %vm580, %v572, %v588
        %v597 = vsel %vm581, %v573, %v589
        %v598 = vld [vmem:[%s3] sm:$0xf]
        %v599 = vld [vmem:[%s3 + $0x4] sm:$0xf]
        %v600 = vld [vmem:[%s3 + $0x8] sm:$0xf]
        %v601 = vld [vmem:[%s3 + $0xc] sm:$0xf]
        %v602 = vld [vmem:[%s3 + $0x10] sm:$0xf]
        %v603 = vld [vmem:[%s3 + $0x14] sm:$0xf]
        %v604 = vld [vmem:[%s3 + $0x18] sm:$0xf]
        %v605 = vld [vmem:[%s3 + $0x1c] sm:$0xf]
        %v606 = vld [vmem:[%s3 + $0x20] sm:$0xf]
        %v607 = vld [vmem:[%s3 + $0x24] sm:$0xf]
        %v608 = vld [vmem:[%s3 + $0x28] sm:$0xf]
        %v609 = vld [vmem:[%s3 + $0x2c] sm:$0xf]
        %v610 = vld [vmem:[%s3 + $0x30] sm:$0xf]
        %v611 = vld [vmem:[%s3 + $0x34] sm:$0xf]
        %v612 = vld [vmem:[%s3 + $0x38] sm:$0xf]
        %v613 = vld [vmem:[%s3 + $0x3c] sm:$0xf]
        %v630 = vunpack.c.l.b16 %v598
        %v631 = vunpack.c.l.b16 %v599
        %v632 = vunpack.c.l.b16 %v600
        %v633 = vunpack.c.l.b16 %v601
        %v634 = vunpack.c.l.b16 %v602
        %v635 = vunpack.c.l.b16 %v603
        %v636 = vunpack.c.l.b16 %v604
        %v637 = vunpack.c.l.b16 %v605
        %v638 = vunpack.c.l.b16 %v606
        %v639 = vunpack.c.l.b16 %v607
        %v640 = vunpack.c.l.b16 %v608
        %v641 = vunpack.c.l.b16 %v609
        %v642 = vunpack.c.l.b16 %v610
        %v643 = vunpack.c.l.b16 %v611
        %v644 = vunpack.c.l.b16 %v612
        %v645 = vunpack.c.l.b16 %v613
        %v646 = vpack.c.b16 %v631, %v630
        %v647 = vpack.c.b16 %v633, %v632
        %v648 = vpack.c.b16 %v635, %v634
        %v649 = vpack.c.b16 %v637, %v636
        %v650 = vpack.c.b16 %v639, %v638
        %v651 = vpack.c.b16 %v641, %v640
        %v652 = vpack.c.b16 %v643, %v642
        %v653 = vpack.c.b16 %v645, %v644
        %662 = vmatprep.subr.bf16.mxu0 0
        %663 = vmatpush1.bf16.msra.mxu0 %v646
        %664 = vmatprep.subr.bf16.mxu0 0
        %665 = vmatpush1.bf16.msra.mxu0 %v647
        %666 = vmatprep.subr.bf16.mxu0 0
        %667 = vmatpush1.bf16.msra.mxu0 %v648
        %668 = vmatprep.subr.bf16.mxu0 0
        %669 = vmatpush1.bf16.msra.mxu0 %v649
        %670 = vmatprep.subr.bf16.mxu0 0
        %671 = vmatpush1.bf16.msra.mxu0 %v650
        %672 = vmatprep.subr.bf16.mxu0 0
        %673 = vmatpush1.bf16.msra.mxu0 %v651
        %674 = vmatprep.subr.bf16.mxu0 0
        %675 = vmatpush1.bf16.msra.mxu0 %v652
        %676 = vmatprep.subr.bf16.mxu0 0
        %677 = vmatpush1.bf16.msra.mxu0 %v653
        %678 = vmatprep.subr.bf16.mxu0 0
        %679 = vmatpush1.bf16.msra.mxu0 0
        %680 = vmatprep.subr.bf16.mxu0 0
        %681 = vmatpush1.bf16.msra.mxu0 0
        %682 = vmatprep.subr.bf16.mxu0 0
        %683 = vmatpush1.bf16.msra.mxu0 0
        %684 = vmatprep.subr.bf16.mxu0 0
        %685 = vmatpush1.bf16.msra.mxu0 0
        %686 = vmatprep.subr.bf16.mxu0 0
        %687 = vmatpush1.bf16.msra.mxu0 0
        %688 = vmatprep.subr.bf16.mxu0 0
        %689 = vmatpush1.bf16.msra.mxu0 0
        %690 = vmatprep.subr.bf16.mxu0 0
        %691 = vmatpush1.bf16.msra.mxu0 0
        %692 = vmatprep.subr.bf16.mxu0 0
        %693 = vmatpush1.bf16.msra.mxu0 0
        %694 = vmatprep.mubr.bf16.mxu0 0
        %695 = vmatmul.mubr.bf16.gmra.mrb[0].mxu0 %v590
        %v696 = vpop.f32.mrb[0].mxu0
        %v697 = vadd.f32 0.0, %v696
        %v698 = vpop.f32.mrb[0].mxu0
        %v699 = vpop.f32.mrb[0].mxu0
        %v700 = vadd.f32 0.0, %v699
        %v701 = vpop.f32.mrb[0].mxu0
        %702 = vmatprep.mubr.bf16.mxu0 0
        %703 = vmatmul.mubr.bf16.gmra.mrb[0].mxu0 %v591
        %v704 = vpop.f32.mrb[0].mxu0
        %v705 = vadd.f32 0.0, %v704
        %v706 = vpop.f32.mrb[0].mxu0
        %v707 = vpop.f32.mrb[0].mxu0
        %v708 = vadd.f32 0.0, %v707
        %v709 = vpop.f32.mrb[0].mxu0
        %710 = vmatprep.mubr.bf16.mxu0 0
        %711 = vmatmul.mubr.bf16.gmra.mrb[0].mxu0 %v592
        %v712 = vpop.f32.mrb[0].mxu0
        %v713 = vadd.f32 0.0, %v712
        %v714 = vpop.f32.mrb[0].mxu0
        %v715 = vpop.f32.mrb[0].mxu0
        %v716 = vadd.f32 0.0, %v715
        %v717 = vpop.f32.mrb[0].mxu0
        %718 = vmatprep.mubr.bf16.mxu0 0
        %719 = vmatmul.mubr.bf16.gmra.mrb[0].mxu0 %v593
        %v720 = vpop.f32.mrb[0].mxu0
        %v721 = vadd.f32 0.0, %v720
        %v722 = vpop.f32.mrb[0].mxu0
        %v723 = vpop.f32.mrb[0].mxu0
        %v724 = vadd.f32 0.0, %v723
        %v725 = vpop.f32.mrb[0].mxu0
        %726 = vmatprep.mubr.bf16.mxu0 0
        %727 = vmatmul.mubr.bf16.gmra.mrb[0].mxu0 %v594
        %v728 = vpop.f32.mrb[0].mxu0
        %v729 = vadd.f32 0.0, %v728
        %v730 = vpop.f32.mrb[0].mxu0
        %v731 = vpop.f32.mrb[0].mxu0
        %v732 = vadd.f32 0.0, %v731
        %v733 = vpop.f32.mrb[0].mxu0
        %734 = vmatprep.mubr.bf16.mxu0 0
        %735 = vmatmul.mubr.bf16.gmra.mrb[0].mxu0 %v595
        %v736 = vpop.f32.mrb[0].mxu0
        %v737 = vadd.f32 0.0, %v736
        %v738 = vpop.f32.mrb[0].mxu0
        %v739 = vpop.f32.mrb[0].mxu0
        %v740 = vadd.f32 0.0, %v739
        %v741 = vpop.f32.mrb[0].mxu0
        %742 = vmatprep.mubr.bf16.mxu0 0
        %743 = vmatmul.mubr.bf16.gmra.mrb[0].mxu0 %v596
        %v744 = vpop.f32.mrb[0].mxu0
        %v745 = vadd.f32 0.0, %v744
        %v746 = vpop.f32.mrb[0].mxu0
        %v747 = vpop.f32.mrb[0].mxu0
        %v748 = vadd.f32 0.0, %v747
        %v749 = vpop.f32.mrb[0].mxu0
        %750 = vmatprep.mubr.bf16.mxu0 0
        %751 = vmatmul.mubr.bf16.gmra.mrb[0].mxu0 %v597
        %v752 = vpop.f32.mrb[0].mxu0
        %v753 = vadd.f32 0.0, %v752
        %v754 = vpop.f32.mrb[0].mxu0
        %v755 = vpop.f32.mrb[0].mxu0
        %v756 = vadd.f32 0.0, %v755
        %v757 = vpop.f32.mrb[0].mxu0
        %758 = vdwg.mxu0
        %v759 = vpack.c.bf16 %v700, %v697
        %v760 = vpack.c.bf16 %v708, %v705
        %v761 = vpack.c.bf16 %v716, %v713
        %v762 = vpack.c.bf16 %v724, %v721
        %v763 = vpack.c.bf16 %v732, %v729
        %v764 = vpack.c.bf16 %v740, %v737
        %v765 = vpack.c.bf16 %v748, %v745
        %v766 = vpack.c.bf16 %v756, %v753
        %v767 = vld [vmem:[%s4] sm:$0x1]
        %v769 = vpack.i.b16 %v767, %v767
        %v771 = vlaneseq
        %v772 = vshrl.u32 %v771, 7
        %v773 = vsub.s32 0, %v772
        %v774 = vrot.slane %v769, %v773
        %v775 = vadd.bf16 %v759, %v774
        %v776 = vadd.bf16 %v760, %v774
        %v777 = vadd.bf16 %v761, %v774
        %v778 = vadd.bf16 %v762, %v774
        %v779 = vadd.bf16 %v763, %v774
        %v780 = vadd.bf16 %v764, %v774
        %v781 = vadd.bf16 %v765, %v774
        %v782 = vadd.bf16 %v766, %v774
        %vm783 = vcmp.ge.bf16.partialorder %v775, 0
        %vm784 = vcmp.ge.bf16.partialorder %v776, 0
        %vm785 = vcmp.ge.bf16.partialorder %v777, 0
        %vm786 = vcmp.ge.bf16.partialorder %v778, 0
        %vm787 = vcmp.ge.bf16.partialorder %v779, 0
        %vm788 = vcmp.ge.bf16.partialorder %v780, 0
        %vm789 = vcmp.ge.bf16.partialorder %v781, 0
        %vm790 = vcmp.ge.bf16.partialorder %v782, 0
        %v791 = vmul.bf16 %v775, 1045249613
        %v792 = vmul.bf16 %v776, 1045249613
        %v793 = vmul.bf16 %v777, 1045249613
        %v794 = vmul.bf16 %v778, 1045249613
        %v795 = vmul.bf16 %v779, 1045249613
        %v796 = vmul.bf16 %v780, 1045249613
        %v797 = vmul.bf16 %v781, 1045249613
        %v798 = vmul.bf16 %v782, 1045249613
        %v799 = vsel %vm783, %v775, %v791
        %v800 = vsel %vm784, %v776, %v792
        %v801 = vsel %vm785, %v777, %v793
        %v802 = vsel %vm786, %v778, %v794
        %v803 = vsel %vm787, %v779, %v795
        %v804 = vsel %vm788, %v780, %v796
        %v805 = vsel %vm789, %v781, %v797
        %v806 = vsel %vm790, %v782, %v798
        %v807 = vld [vmem:[%s5] sm:$0xf]
        %v808 = vld [vmem:[%s5 + $0x4] sm:$0xf]
        %v809 = vld [vmem:[%s5 + $0x8] sm:$0xf]
        %v810 = vld [vmem:[%s5 + $0xc] sm:$0xf]
        %v811 = vld [vmem:[%s5 + $0x10] sm:$0xf]
        %v812 = vld [vmem:[%s5 + $0x14] sm:$0xf]
        %v813 = vld [vmem:[%s5 + $0x18] sm:$0xf]
        %v814 = vld [vmem:[%s5 + $0x1c] sm:$0xf]
        %v823 = vunpack.c.l.b16 %v807
        %v824 = vunpack.c.l.b16 %v808
        %v825 = vunpack.c.l.b16 %v809
        %v826 = vunpack.c.l.b16 %v810
        %v827 = vunpack.c.l.b16 %v811
        %v828 = vunpack.c.l.b16 %v812
        %v829 = vunpack.c.l.b16 %v813
        %v830 = vunpack.c.l.b16 %v814
        %v831 = vpack.c.b16 %v824, %v823
        %v832 = vpack.c.b16 %v826, %v825
        %v833 = vpack.c.b16 %v828, %v827
        %v834 = vpack.c.b16 %v830, %v829
        %vm839 = vcmask 523264
        %v841 = vsel %vm839, %v799, 0
        %v844 = vsel %vm839, %v800, 0
        %v847 = vsel %vm839, %v801, 0
        %v850 = vsel %vm839, %v802, 0
        %v853 = vsel %vm839, %v803, 0
        %v856 = vsel %vm839, %v804, 0
        %v859 = vsel %vm839, %v805, 0
        %v862 = vsel %vm839, %v806, 0
        %864 = vmatprep.subr.bf16.mxu0 0
        %865 = vmatpush1.bf16.msra.mxu0 %v831
        %866 = vmatprep.subr.bf16.mxu0 0
        %867 = vmatpush1.bf16.msra.mxu0 %v832
        %868 = vmatprep.subr.bf16.mxu0 0
        %869 = vmatpush1.bf16.msra.mxu0 %v833
        %870 = vmatprep.subr.bf16.mxu0 0
        %871 = vmatpush1.bf16.msra.mxu0 %v834
        %872 = vmatprep.subr.bf16.mxu0 0
        %873 = vmatpush1.bf16.msra.mxu0 0
        %874 = vmatprep.subr.bf16.mxu0 0
        %875 = vmatpush1.bf16.msra.mxu0 0
        %876 = vmatprep.subr.bf16.mxu0 0
        %877 = vmatpush1.bf16.msra.mxu0 0
        %878 = vmatprep.subr.bf16.mxu0 0
        %879 = vmatpush1.bf16.msra.mxu0 0
        %880 = vmatprep.subr.bf16.mxu0 0
        %881 = vmatpush1.bf16.msra.mxu0 0
        %882 = vmatprep.subr.bf16.mxu0 0
        %883 = vmatpush1.bf16.msra.mxu0 0
        %884 = vmatprep.subr.bf16.mxu0 0
        %885 = vmatpush1.bf16.msra.mxu0 0
        %886 = vmatprep.subr.bf16.mxu0 0
        %887 = vmatpush1.bf16.msra.mxu0 0
        %888 = vmatprep.subr.bf16.mxu0 0
        %889 = vmatpush1.bf16.msra.mxu0 0
        %890 = vmatprep.subr.bf16.mxu0 0
        %891 = vmatpush1.bf16.msra.mxu0 0
        %892 = vmatprep.subr.bf16.mxu0 0
        %893 = vmatpush1.bf16.msra.mxu0 0
        %894 = vmatprep.subr.bf16.mxu0 0
        %895 = vmatpush1.bf16.msra.mxu0 0
        %896 = vmatprep.mubr.bf16.mxu0 0
        %897 = vmatmul.mubr.bf16.gmra.mrb[0].mxu0 %v841
        %v898 = vpop.f32.mrb[0].mxu0
        %v899 = vadd.f32 0.0, %v898
        %v900 = vpop.f32.mrb[0].mxu0
        %v901 = vpop.f32.mrb[0].mxu0
        %v902 = vadd.f32 0.0, %v901
        %v903 = vpop.f32.mrb[0].mxu0
        %904 = vmatprep.mubr.bf16.mxu0 0
        %905 = vmatmul.mubr.bf16.gmra.mrb[0].mxu0 %v844
        %v906 = vpop.f32.mrb[0].mxu0
        %v907 = vadd.f32 0.0, %v906
        %v908 = vpop.f32.mrb[0].mxu0
        %v909 = vpop.f32.mrb[0].mxu0
        %v910 = vadd.f32 0.0, %v909
        %v911 = vpop.f32.mrb[0].mxu0
        %912 = vmatprep.mubr.bf16.mxu0 0
        %913 = vmatmul.mubr.bf16.gmra.mrb[0].mxu0 %v847
        %v914 = vpop.f32.mrb[0].mxu0
        %v915 = vadd.f32 0.0, %v914
        %v916 = vpop.f32.mrb[0].mxu0
        %v917 = vpop.f32.mrb[0].mxu0
        %v918 = vadd.f32 0.0, %v917
        %v919 = vpop.f32.mrb[0].mxu0
        %920 = vmatprep.mubr.bf16.mxu0 0
        %921 = vmatmul.mubr.bf16.gmra.mrb[0].mxu0 %v850
        %v922 = vpop.f32.mrb[0].mxu0
        %v923 = vadd.f32 0.0, %v922
        %v924 = vpop.f32.mrb[0].mxu0
        %v925 = vpop.f32.mrb[0].mxu0
        %v926 = vadd.f32 0.0, %v925
        %v927 = vpop.f32.mrb[0].mxu0
        %928 = vmatprep.mubr.bf16.mxu0 0
        %929 = vmatmul.mubr.bf16.gmra.mrb[0].mxu0 %v853
        %v930 = vpop.f32.mrb[0].mxu0
        %v931 = vadd.f32 0.0, %v930
        %v932 = vpop.f32.mrb[0].mxu0
        %v933 = vpop.f32.mrb[0].mxu0
        %v934 = vadd.f32 0.0, %v933
        %v935 = vpop.f32.mrb[0].mxu0
        %936 = vmatprep.mubr.bf16.mxu0 0
        %937 = vmatmul.mubr.bf16.gmra.mrb[0].mxu0 %v856
        %v938 = vpop.f32.mrb[0].mxu0
        %v939 = vadd.f32 0.0, %v938
        %v940 = vpop.f32.mrb[0].mxu0
        %v941 = vpop.f32.mrb[0].mxu0
        %v942 = vadd.f32 0.0, %v941
        %v943 = vpop.f32.mrb[0].mxu0
        %944 = vmatprep.mubr.bf16.mxu0 0
        %945 = vmatmul.mubr.bf16.gmra.mrb[0].mxu0 %v859
        %v946 = vpop.f32.mrb[0].mxu0
        %v947 = vadd.f32 0.0, %v946
        %v948 = vpop.f32.mrb[0].mxu0
        %v949 = vpop.f32.mrb[0].mxu0
        %v950 = vadd.f32 0.0, %v949
        %v951 = vpop.f32.mrb[0].mxu0
        %952 = vmatprep.mubr.bf16.mxu0 0
        %953 = vmatmul.mubr.bf16.gmra.mrb[0].mxu0 %v862
        %v954 = vpop.f32.mrb[0].mxu0
        %v955 = vadd.f32 0.0, %v954
        %v956 = vpop.f32.mrb[0].mxu0
        %v957 = vpop.f32.mrb[0].mxu0
        %v958 = vadd.f32 0.0, %v957
        %v959 = vpop.f32.mrb[0].mxu0
        %960 = vdwg.mxu0
        %v961 = vpack.c.bf16 %v902, %v899
        %v962 = vpack.c.bf16 %v910, %v907
        %v963 = vpack.c.bf16 %v918, %v915
        %v964 = vpack.c.bf16 %v926, %v923
        %v965 = vpack.c.bf16 %v934, %v931
        %v966 = vpack.c.bf16 %v942, %v939
        %v967 = vpack.c.bf16 %v950, %v947
        %v968 = vpack.c.bf16 %v958, %v955
        %v969 = vld [vmem:[%s6] sm:$0x1]
        %v971 = vpack.i.b16 %v969, %v969
        %v973 = vlaneseq
        %v974 = vshrl.u32 %v973, 7
        %v975 = vsub.s32 0, %v974
        %v976 = vrot.slane %v971, %v975
        %v977 = vadd.bf16 %v961, %v976
        %v978 = vadd.bf16 %v962, %v976
        %v979 = vadd.bf16 %v963, %v976
        %v980 = vadd.bf16 %v964, %v976
        %v981 = vadd.bf16 %v965, %v976
        %v982 = vadd.bf16 %v966, %v976
        %v983 = vadd.bf16 %v967, %v976
        %v984 = vadd.bf16 %v968, %v976
        %vm985 = vcmp.ge.bf16.partialorder %v977, 0
        %vm986 = vcmp.ge.bf16.partialorder %v978, 0
        %vm987 = vcmp.ge.bf16.partialorder %v979, 0
        %vm988 = vcmp.ge.bf16.partialorder %v980, 0
        %vm989 = vcmp.ge.bf16.partialorder %v981, 0
        %vm990 = vcmp.ge.bf16.partialorder %v982, 0
        %vm991 = vcmp.ge.bf16.partialorder %v983, 0
        %vm992 = vcmp.ge.bf16.partialorder %v984, 0
        %v993 = vmul.bf16 %v977, 1045249613
        %v994 = vmul.bf16 %v978, 1045249613
        %v995 = vmul.bf16 %v979, 1045249613
        %v996 = vmul.bf16 %v980, 1045249613
        %v997 = vmul.bf16 %v981, 1045249613
        %v998 = vmul.bf16 %v982, 1045249613
        %v999 = vmul.bf16 %v983, 1045249613
        %v1000 = vmul.bf16 %v984, 1045249613
        %v1001 = vsel %vm985, %v977, %v993
        %v1002 = vsel %vm986, %v978, %v994
        %v1003 = vsel %vm987, %v979, %v995
        %v1004 = vsel %vm988, %v980, %v996
        %v1005 = vsel %vm989, %v981, %v997
        %v1006 = vsel %vm990, %v982, %v998
        %v1007 = vsel %vm991, %v983, %v999
        %v1008 = vsel %vm992, %v984, %v1000
        %v1009 = vld [vmem:[%s7] sm:$0x1]
        %v1010 = vld [vmem:[#allocation2] sm:$0x1]
        %1012 = vset.pattern.permute.xlu0 0
        %1013 = vperm.xlu0 %1012, %v1010
        %v1014 = vpop.permute.xlu0 %1013
        %v1016 = vlaneseq
        %v1017 = vshrl.u32 %v1016, 7
        %v1018 = vsub.s32 0, %v1017
        %v1019 = vrot.slane %v1014, %v1018
        %vm1020 = vcmask 261120
        %v1022 = vsel %vm1020, %v1009, 0
        %v1025 = vsel %vm1020, %v1001, 0
        %v1028 = vsel %vm1020, %v1002, 0
        %v1031 = vsel %vm1020, %v1003, 0
        %v1034 = vsel %vm1020, %v1004, 0
        %v1037 = vsel %vm1020, %v1005, 0
        %v1040 = vsel %vm1020, %v1006, 0
        %v1043 = vsel %vm1020, %v1007, 0
        %v1046 = vsel %vm1020, %v1008, 0
        %1048 = vmatprep.subr.bf16.mxu0 0
        %1049 = vmatpush1.bf16.xpose.msra.mxu0 %v1025
        %1050 = vmatprep.subr.bf16.mxu0 0
        %1051 = vmatpush1.bf16.xpose.msra.mxu0 %v1028
        %1052 = vmatprep.subr.bf16.mxu0 0
        %1053 = vmatpush1.bf16.xpose.msra.mxu0 %v1031
        %1054 = vmatprep.subr.bf16.mxu0 0
        %1055 = vmatpush1.bf16.xpose.msra.mxu0 %v1034
        %1056 = vmatprep.subr.bf16.mxu0 0
        %1057 = vmatpush1.bf16.xpose.msra.mxu0 %v1037
        %1058 = vmatprep.subr.bf16.mxu0 0
        %1059 = vmatpush1.bf16.xpose.msra.mxu0 %v1040
        %1060 = vmatprep.subr.bf16.mxu0 0
        %1061 = vmatpush1.bf16.xpose.msra.mxu0 %v1043
        %1062 = vmatprep.subr.bf16.mxu0 0
        %1063 = vmatpush1.bf16.xpose.msra.mxu0 %v1046
        %1064 = vmatprep.subr.bf16.mxu0 0
        %1065 = vmatpush1.bf16.xpose.msra.mxu0 0
        %1066 = vmatprep.subr.bf16.mxu0 0
        %1067 = vmatpush1.bf16.xpose.msra.mxu0 0
        %1068 = vmatprep.subr.bf16.mxu0 0
        %1069 = vmatpush1.bf16.xpose.msra.mxu0 0
        %1070 = vmatprep.subr.bf16.mxu0 0
        %1071 = vmatpush1.bf16.xpose.msra.mxu0 0
        %1072 = vmatprep.subr.bf16.mxu0 0
        %1073 = vmatpush1.bf16.xpose.msra.mxu0 0
        %1074 = vmatprep.subr.bf16.mxu0 0
        %1075 = vmatpush1.bf16.xpose.msra.mxu0 0
        %1076 = vmatprep.subr.bf16.mxu0 0
        %1077 = vmatpush1.bf16.xpose.msra.mxu0 0
        %1078 = vmatprep.subr.bf16.mxu0 0
        %1079 = vmatpush1.bf16.xpose.msra.mxu0 0
        %1080 = vmatprep.mubr.bf16.mxu0 0
        %1081 = vmatmul.mubr.bf16.gmra.mrb[0].mxu0 %v1022
        %v1082 = vpop.f32.mrb[0].mxu0
        %v1083 = vadd.f32 %v1019, %v1082
        %v1084 = vpop.f32.mrb[0].mxu0
        %v1085 = vpop.f32.mrb[0].mxu0
        %v1086 = vpop.f32.mrb[0].mxu0
        %1087 = vdwg.mxu0
        %1088 = vst [vmem:[%s357] sm:$0x1] %v1083
        %s1089 = sand.u32 %s230, 1
        %s1090 = scalar_lea.sflag [#allocation5], %s1089
        %s1091 = sand.u32 %s230, 1
        %s1092 = scalar_lea.vmem [#allocation6], %s1091
        // Predicated region
        $region61: #{tpu_custom_call.1} parent=55 // pred_check
          %p1093 = pneg %p240
        $region62: #{tpu_custom_call.1} parent=55 // pred_check_branch
          %1095 = sbr.rel (%p1093) target = $region64
        $region63: #{tpu_custom_call.1} parent=55 // pred_region
          %s1097 = ssub.s32 16, 16
          %1098 = vsyncadd %s1090, %s1097
          %s1099 = smul.addr %s28, 16
          %s1100 = scalar_lea.hbm %s9, %s1099
          %s1102 = sshll.u32 %s1092, 4
          %s1103 = int_to_ptr.vmem [resolvable:$true] %s1102
          %1105 = dma.vmem_to_hbm [thread:$0]  %s1103, 16, %s1100, %s1090
        $region64: #{tpu_custom_call.1} parent=55 // pred_fallthru
          _
      $region56: #{tpu_custom_call.1} parent=5 // pred_fallthru
        _
      %p1106 = scmp.le.s32.totalorder 2, %s23
      // Predicated region
      $region65: #{tpu_custom_call.1} parent=5 // pred_check
        %p1107 = pneg %p1106
      $region66: #{tpu_custom_call.1} parent=5 // pred_check_branch
        %1109 = sbr.rel (%p1107) target = $region68
      $region67: #{tpu_custom_call.1} parent=5 // pred_region
        %s1110 = ssub.s32 %s23, 2
        // Predicated region
        $region69: #{tpu_custom_call.1} parent=67 // pred_check
          %p1111 = pneg %p246
        $region70: #{tpu_custom_call.1} parent=67 // pred_check_branch
          %1113 = sbr.rel (%p1111) target = $region72
        $region71: #{tpu_custom_call.1} parent=67 // pred_region
          %s1114 = sand.u32 %s231, 1
          %s1115 = scalar_lea.sflag [#allocation5], %s1114
          %s1116 = sand.u32 %s231, 1
          %s1117 = scalar_lea.vmem [#allocation6], %s1116
          %1118 = dma.done %s1115, 16
        $region72: #{tpu_custom_call.1} parent=67 // pred_fallthru
          _
      $region68: #{tpu_custom_call.1} parent=5 // pred_fallthru
        _
    $region6: #{tpu_custom_call.1} parent=1 // loop_footer
      %s27 = sadd.s32 1, %s23
    $region7: #{tpu_custom_call.1} parent=1 // loop_footer_branch
      %22 = sbr.rel target = $region3
    $region8: #{tpu_custom_call.1} parent=1 // loop_exit
      _
    %1119 = vsyncpa [#allocation4], 1
    %s1120 = scalar_lea.sflag [#allocation4], 1
    %1121 = vsyncpa %s1120, 1
    %1122 = vsyncpa [#allocation5], 1
    %s1123 = scalar_lea.sflag [#allocation5], 1
    %1124 = vsyncpa %s1123, 1

</llo_original>
